<compile_context>
chip_gen: v7x
topology: tpu7x:2x2x1
jax: 0.10.0
libtpu: 0.0.40
codegen_flags: <defaults>
</compile_context>

<pallas_src>
import jax
import jax.numpy as jnp
from jax.experimental import pallas as pl
from jax.experimental.pallas import tpu as pltpu


_TARGET_BLOCK_BYTES = 4 * 1024 * 1024     # ~4 MiB per block (amortizes ~0.35us/step)
_MIN_SPLIT_BYTES = 1 * 1024 * 1024        # >1 MiB -> aim for >=4 grid steps (v7x megacore)
_SMALL_FAST_PATH_ELEMS = 16 * 1024        # tiny tensors: fused XLA clamp is faster


def _make_clip_kernel(low, high):
    # low/high are Python scalars -> inlined literals, weak-typed, dtype-preserving.
    def kernel(x_ref, o_ref):
        o_ref[...] = jnp.clip(x_ref[...], low, high)
    return kernel


def _choose_tiling(shape, itemsize, sub):
    """Pick a block shape / grid that tiles only leading dims (last two dims full,
    except the sublane dim which may be blocked in multiples of `sub`)."""
    ndim = len(shape)
    # suffix[i] = bytes of shape[i:]  (suffix[ndim] = itemsize)
    suffix = [itemsize] * (ndim + 1)
    for i in range(ndim - 1, -1, -1):
        suffix[i] = suffix[i + 1] * shape[i]
    total_bytes = suffix[0]

    if total_bytes > _MIN_SPLIT_BYTES:
        # Cap block so grid has >=4 steps, but never larger than the 4 MiB target.
        target = min(_TARGET_BLOCK_BYTES, -(-total_bytes // 4))
    else:
        target = total_bytes  # single full block

    # Rightmost pivot dim (never the lane dim) whose suffix still covers the target.
    pivot = 0
    for i in range(ndim - 2, -1, -1):
        if suffix[i] >= target:
            pivot = i
            break

    unit = suffix[pivot + 1]             # bytes of one slab right of the pivot
    count = max(1, target // unit)       # pivot-dim extent of one block
    if pivot == ndim - 2:
        # Sublane dim: must be a multiple of the packed-sublane quantum, or full.
        count = max(sub, (count // sub) * sub)
        # TODO(synk): pathological last dims (>~100K lanes) would need lane-dim
        # tiling too; a single sublane-quantum row group could exceed VMEM.
    count = min(count, shape[pivot])

    block = [1] * pivot + [count] + list(shape[pivot + 1:])
    grid = tuple(shape[:pivot]) + (pl.cdiv(shape[pivot], count),)
    return tuple(block), grid


def clip_pallas(x, low, high):
    """Elementwise clamp of x to [low, high] using a Pallas TPU kernel."""
    orig_shape = x.shape
    dtype = x.dtype
    n = x.size

    if jnp.issubdtype(dtype, jnp.integer):
        low_s, high_s = int(low), int(high)
    else:
        low_s, high_s = float(low), float(high)

    # Fast path: tiny tensors (or <2-D) — pallas_call fixed cost dwarfs the work.
    if n < _SMALL_FAST_PATH_ELEMS or x.ndim < 2:
        # TODO(synk): large 1-D inputs also take the XLA path; giving them a
        # (rows,128) view would force a relayout copy anyway.
        return jnp.clip(x, low_s, high_s)

    itemsize = jnp.dtype(dtype).itemsize
    packing = max(1, 4 // itemsize)       # 1 for 32-bit, 2 for bf16, 4 for int8
    sub = 8 * packing                     # minimum sublane block quantum

    block_shape, grid = _choose_tiling(orig_shape, itemsize, sub)
    n_grid = len(grid)
    trailing = (0,) * (x.ndim - n_grid)

    def index_map(*g):
        return tuple(g) + trailing

    return pl.pallas_call(
        _make_clip_kernel(low_s, high_s),
        out_shape=jax.ShapeDtypeStruct(orig_shape, dtype),
        grid=grid,
        in_specs=[pl.BlockSpec(block_shape, index_map)],
        out_specs=pl.BlockSpec(block_shape, index_map),
        compiler_params=pltpu.CompilerParams(
            dimension_semantics=("parallel",) * n_grid,
            vmem_limit_bytes=32 * 1024 * 1024,
        ),
        cost_estimate=pl.CostEstimate(
            flops=2 * n,
            bytes_accessed=2 * n * itemsize,
            transcendentals=0,
        ),
    )(x)


class FClipTestPallas:
    """JAX/Pallas equivalent of the PyTorch FClipTest module."""

    def __init__(self, low, high):
        self.low = low
        self.high = high

    def __call__(self, x):
        return clip_pallas(x, self.low, self.high)


if __name__ == "__main__":
    key = jax.random.PRNGKey(0)
    k1, k2 = jax.random.split(key)

    low, high = -1.0, 1.0
    mod = FClipTestPallas(low, high)

    # 1) Module-spec-sized tiny input (takes the XLA fast path by design).
    x_small = jax.random.normal(k1, (2, 4, 16, 16), dtype=jnp.float32) * 3.0
    out_small = jax.block_until_ready(mod(x_small))
    assert out_small.shape == x_small.shape and out_small.dtype == x_small.dtype
    assert jnp.allclose(out_small, jnp.clip(x_small, low, high))

    # 2) Slightly larger input that exercises the Pallas kernel: grid of 5 over
    #    a leading dim of 9 (non-divisible -> edge-block masking) and a last
    #    dim of 160 (not a multiple of 128 -> full-dim lane block).
    x_big = jax.random.normal(k2, (9, 3, 64, 160), dtype=jnp.float32) * 3.0
    out_big = jax.block_until_ready(mod(x_big))
    assert out_big.shape == x_big.shape and out_big.dtype == x_big.dtype
    assert jnp.allclose(out_big, jnp.clip(x_big, low, high))

    print("KERNEL_OK")
</pallas_src>

<mosaic_0001>
module attributes {stable_mosaic.version = 11 : i64} {
  func.func @kernel(%arg0: i32, %arg1: memref<2x3x64x160xf32, #tpu.memory_space<vmem>>, %arg2: memref<2x3x64x160xf32, #tpu.memory_space<vmem>>) attributes {dimension_semantics = [#tpu.dimension_semantics<parallel>], iteration_bounds = array<i64: 5>, scalar_prefetch = 0 : i64, scratch_operands = 0 : i64, tpu.core_type = #tpu.core_type<tc>, window_params = [{transform_indices = @transform_0, window_bounds = array<i64: 2, 3, 64, 160>}, {transform_indices = @transform_1, window_bounds = array<i64: 2, 3, 64, 160>}]} {
    %c0 = arith.constant 0 : index
    %c0_0 = arith.constant 0 : index
    %c0_1 = arith.constant 0 : index
    %c0_2 = arith.constant 0 : index
    %0 = vector.load %arg1[%c0, %c0_0, %c0_1, %c0_2] : memref<2x3x64x160xf32, #tpu.memory_space<vmem>>, vector<2x3x64x160xf32>
    %cst = arith.constant -1.000000e+00 : f32
    %cst_3 = arith.constant 1.000000e+00 : f32
    %1 = vector.broadcast %cst : f32 to vector<2x3x64x160xf32>
    %2 = arith.maximumf %1, %0 : vector<2x3x64x160xf32>
    %3 = vector.broadcast %cst_3 : f32 to vector<2x3x64x160xf32>
    %4 = arith.minimumf %3, %2 : vector<2x3x64x160xf32>
    %c0_4 = arith.constant 0 : index
    %c0_5 = arith.constant 0 : index
    %c0_6 = arith.constant 0 : index
    %c0_7 = arith.constant 0 : index
    %5 = vector.load %arg2[%c0_4, %c0_5, %c0_6, %c0_7] : memref<2x3x64x160xf32, #tpu.memory_space<vmem>>, vector<2x3x64x160xf32>
    tpu.vector_store %arg2[%c0_4, %c0_5, %c0_6, %c0_7], %4 {strides = array<i32>} : memref<2x3x64x160xf32, #tpu.memory_space<vmem>>, vector<2x3x64x160xf32>,
    return
  }
  func.func @transform_0(%arg0: i32) -> (i32, i32, i32, i32) {
    %c0_i32 = arith.constant 0 : i32
    %c0_i32_0 = arith.constant 0 : i32
    %c0_i32_1 = arith.constant 0 : i32
    %c0_i32_2 = arith.constant 0 : i32
    return %arg0, %c0_i32, %c0_i32_0, %c0_i32_1 : i32, i32, i32, i32
  }
  func.func @transform_1(%arg0: i32) -> (i32, i32, i32, i32) {
    %c0_i32 = arith.constant 0 : i32
    %c0_i32_0 = arith.constant 0 : i32
    %c0_i32_1 = arith.constant 0 : i32
    %c0_i32_2 = arith.constant 0 : i32
    return %arg0, %c0_i32, %c0_i32_0, %c0_i32_1 : i32, i32, i32, i32
  }
}

</mosaic_0001>

<llo_original>
// kernel: tpu_custom_call.1
$region0: #{tpu_custom_call.1}
  #allocation0 [shape = 'u32[]', space=smem, size = 0x4, offset = 0x4, fixed_abs, tag = 'smem constant byte address 0x4 - core index']
  #allocation1 [shape = 'u32[144,128]{1,0:T(1,128)}', space=vmem, size = 0x12000, scoped, tag = 'internal scratch']
  %s0 = inlined_call_operand.hbm [shape: f32[9,3,64,160], index: 0, kind: input, shape index: {}]
  %s1 = inlined_call_operand.hbm [shape: f32[9,3,64,160], index: 1, kind: output, shape index: {}]
  %s2 = sld [smem:[#allocation0]]
  $region41: #{tpu_custom_call.1} parent=0
    _
  %s4 = ssub.s32 1, %s2
  %s5 = scalar_select 0, %s4, %s2
  $region1: #{tpu_custom_call.1} parent=0
    #allocation2 [shape = 'u8[786432]{0}', space=vmem, size = 0xc0000, scoped, tag = 'input window, operand 0']
    #allocation3 [shape = 's32[2]{0}', space=sflag, size = 0x8, scoped, tag = 'scoped memory for tpu_custom_call.1']
    #allocation4 [shape = 's32[2]{0}', space=sflag, size = 0x8, scoped, tag = 'scoped memory for tpu_custom_call.1']
    #allocation5 [shape = 'u8[786432]{0}', space=vmem, size = 0xc0000, scoped, tag = 'output window, operand 0']
    %6 = vsyncpa [#allocation3], 0
    %s7 = scalar_lea.sflag [#allocation3], 1
    %8 = vsyncpa %s7, 0
    %9 = vsyncpa [#allocation4], 0
    %s10 = scalar_lea.sflag [#allocation4], 1
    %11 = vsyncpa %s10, 0
    loop: start=0, step=1, limit=7
    $region2: #{tpu_custom_call.1} parent=1 // loop_pre_header
      _
    $region3: #{tpu_custom_call.1} parent=1 // loop_header
      %s13 = sphi 0, %s17
      %p14 = scmp.ge.s32.totalorder %s13, 7
      %s23 = sphi 0, %s25
      %s26 = sphi 0, %s23
      %s27 = sphi 0, %s26
      %s43 = sphi 0, %s27
      %s49 = sphi 0, %s51
      %s52 = sphi 0, %s49
      %s53 = sphi 0, %s52
      %s69 = sphi 0, %s53
    $region4: #{tpu_custom_call.1} parent=1 // loop_header_branch
      %16 = sbr.rel (%p14) target = $region8
    $region5: #{tpu_custom_call.1} parent=1 // loop_body
      %s18 = ssub.s32 %s13, 1
      %s19 = ssub.s32 %s13, 2
      %s20 = sadd.s32 %s13, 1
      %s21 = ssub.s32 %s13, %s20
      %p22 = scmp.eq.s32.totalorder %s21, 0
      %s24 = sadd.s32 %s23, 1
      %s25 = scalar_select %p22, %s23, %s24
      %p28 = pneg %p22
      %p29 = scmp.eq.s32.totalorder %s13, 4
      %p30 = por %p28, %p29
      %p31 = scmp.ne.s32.totalorder %s23, %s26
      %p32 = scmp.eq.s32.totalorder %s13, 0
      %p33 = por %p31, %p32
      %p34 = scmp.ne.s32.totalorder %s23, %s26
      %p35 = scmp.eq.s32.totalorder %s18, 4
      %p36 = por %p34, %p35
      %p37 = scmp.ne.s32.totalorder %s26, %s27
      %p38 = scmp.eq.s32.totalorder %s18, 0
      %p39 = por %p37, %p38
      %p40 = scmp.ne.s32.totalorder %s26, %s27
      %p41 = scmp.eq.s32.totalorder %s19, 4
      %p42 = por %p40, %p41
      %p44 = scmp.ne.s32.totalorder %s27, %s43
      %p45 = scmp.eq.s32.totalorder %s19, 0
      %p46 = por %p44, %p45
      %s47 = ssub.s32 %s13, %s20
      %p48 = scmp.eq.s32.totalorder %s47, 0
      %s50 = sadd.s32 %s49, 1
      %s51 = scalar_select %p48, %s49, %s50
      %p54 = pneg %p48
      %p55 = scmp.eq.s32.totalorder %s13, 4
      %p56 = por %p54, %p55
      %p57 = scmp.ne.s32.totalorder %s49, %s52
      %p58 = scmp.eq.s32.totalorder %s13, 0
      %p59 = por %p57, %p58
      %p60 = scmp.ne.s32.totalorder %s49, %s52
      %p61 = scmp.eq.s32.totalorder %s18, 4
      %p62 = por %p60, %p61
      %p63 = scmp.ne.s32.totalorder %s52, %s53
      %p64 = scmp.eq.s32.totalorder %s18, 0
      %p65 = por %p63, %p64
      %p66 = scmp.ne.s32.totalorder %s52, %s53
      %p67 = scmp.eq.s32.totalorder %s19, 4
      %p68 = por %p66, %p67
      %p70 = scmp.ne.s32.totalorder %s53, %s69
      %p71 = scmp.eq.s32.totalorder %s19, 0
      %p72 = por %p70, %p71
      %p73 = scmp.le.s32.totalorder 1, %s13
      %p74 = scmp.lt.s32.totalorder %s13, 6
      %p75 = pnand %p73, %p74
      %p76 = pneg %p75
      // Predicated region
      $region9: #{tpu_custom_call.1} parent=5 // pred_check
        _
      $region10: #{tpu_custom_call.1} parent=5 // pred_check_branch
        %78 = sbr.rel (%p75) target = $region12
      $region11: #{tpu_custom_call.1} parent=5 // pred_region
        %s79 = ssub.s32 %s13, 1
      $region12: #{tpu_custom_call.1} parent=5 // pred_fallthru
        _
      %p80 = scmp.lt.s32.totalorder %s13, 5
      // Predicated region
      $region13: #{tpu_custom_call.1} parent=5 // pred_check
        %p81 = pneg %p80
      $region14: #{tpu_custom_call.1} parent=5 // pred_check_branch
        %83 = sbr.rel (%p81) target = $region16
      $region15: #{tpu_custom_call.1} parent=5 // pred_region
        // Predicated region
        $region17: #{tpu_custom_call.1} parent=15 // pred_check
          %p84 = pneg %p33
        $region18: #{tpu_custom_call.1} parent=15 // pred_check_branch
          %86 = sbr.rel (%p84) target = $region20
        $region19: #{tpu_custom_call.1} parent=15 // pred_region
          %s87 = sand.u32 %s23, 1
          %s88 = scalar_lea.sflag [#allocation3], %s87
          %s89 = sand.u32 %s23, 1
          %s90 = smul.addr %s89, 768
          %s91 = scalar_lea.vmem [#allocation2], %s90
          %s92 = smul.u32 2, %s13
          %s93 = ssub.s32 9, %s92
          %p94 = scmp.lt.s32.totalorder %s93, 2
          %s95 = scalar_select %p94, %s93, 2
          %s96 = smul.u32 128, %s95
          %s97 = smul.u32 %s96, 3
          %s98 = smul.u32 %s97, 8
          %s99 = smul.u32 %s98, 2
          %s101 = ssub.s32 12288, %s99
          %102 = vsyncadd %s88, %s101
          %p103 = scmp.ne.s32.totalorder 0, %s99
          %s104 = smul.addr %s92, 48
          %s105 = smul.addr %s104, 128
          %s106 = scalar_lea.hbm %s0, %s105
          %s107 = smul.u32 %s95, 24
          %s108 = smul.u32 16, %s107
          %s109 = sshll.u32 %s91, 4
          %s110 = int_to_ptr.vmem [resolvable:$true] %s109
          %s111 = sshll.u32 %s108, 4
          %115 = dma.hbm_to_vmem [thread:$0]  (%p103), %s106, %s111, %s110, %s88, 256, 256, 16
        $region20: #{tpu_custom_call.1} parent=15 // pred_fallthru
          _
      $region16: #{tpu_custom_call.1} parent=5 // pred_fallthru
        _
      %p116 = scmp.le.s32.totalorder 1, %s13
      %p117 = scmp.lt.s32.totalorder %s13, 6
      %p118 = pnand %p116, %p117
      %p119 = pneg %p118
      // Predicated region
      $region21: #{tpu_custom_call.1} parent=5 // pred_check
        _
      $region22: #{tpu_custom_call.1} parent=5 // pred_check_branch
        %121 = sbr.rel (%p118) target = $region24
      $region23: #{tpu_custom_call.1} parent=5 // pred_region
        %s122 = ssub.s32 %s13, 1
        %s123 = sand.u32 %s26, 1
        %s124 = scalar_lea.sflag [#allocation3], %s123
        %s125 = sand.u32 %s26, 1
        %s126 = smul.addr %s125, 768
        %s127 = scalar_lea.vmem [#allocation2], %s126
        // Predicated region
        $region25: #{tpu_custom_call.1} parent=23 // pred_check
          %p128 = pneg %p39
        $region26: #{tpu_custom_call.1} parent=23 // pred_check_branch
          %130 = sbr.rel (%p128) target = $region28
        $region27: #{tpu_custom_call.1} parent=23 // pred_region
          %131 = dma.done %s124, 12288
        $region28: #{tpu_custom_call.1} parent=23 // pred_fallthru
          _
        %s132 = sand.u32 %s26, 1
        %s133 = scalar_lea.sflag [#allocation3], %s132
        %s134 = sand.u32 %s26, 1
        %s135 = smul.addr %s134, 768
        %s136 = scalar_lea.vmem [#allocation2], %s135
        %p137 = pneg %p39
        %p138 = pneg %p36
        %p139 = pneg %p65
        %p140 = pneg %p62
        %s141 = sand.u32 %s52, 1
        %s142 = scalar_lea.sflag [#allocation4], %s141
        %s143 = sand.u32 %s52, 1
        %s144 = smul.addr %s143, 768
        %s145 = scalar_lea.vmem [#allocation5], %s144
        %s146 = smul.u32 2, %s18
        %s147 = ssub.s32 9, %s146
        %p148 = scmp.lt.s32.totalorder %s147, 2
        %s149 = scalar_select %p148, %s147, 2
        %s150 = smul.u32 128, %s149
        %s151 = smul.u32 %s150, 3
        %s152 = smul.u32 %s151, 8
        %s153 = smul.u32 %s152, 2
        %s154 = smul.u32 2, %s18
        %s155 = ssub.s32 9, %s154
        %p156 = scmp.lt.s32.totalorder %s155, 2
        %s157 = scalar_select %p156, %s155, 2
        %s158 = smul.u32 128, %s157
        %s159 = smul.u32 %s158, 3
        %s160 = smul.u32 %s159, 8
        %s161 = smul.u32 %s160, 2
        %v162 = vld [vmem:[%s127] sm:$0xff]
        %v163 = vld [vmem:[%s127 + $0x8] sm:$0xff]
        %v164 = vld [vmem:[%s127 + $0x10] sm:$0xff]
        %v165 = vld [vmem:[%s127 + $0x18] sm:$0xff]
        %v166 = vld [vmem:[%s127 + $0x20] sm:$0xff]
        %v167 = vld [vmem:[%s127 + $0x28] sm:$0xff]
        %v168 = vld [vmem:[%s127 + $0x30] sm:$0xff]
        %v169 = vld [vmem:[%s127 + $0x38] sm:$0xff]
        %v170 = vld [vmem:[%s127 + $0x40] sm:$0xff]
        %v171 = vld [vmem:[%s127 + $0x48] sm:$0xff]
        %v172 = vld [vmem:[%s127 + $0x50] sm:$0xff]
        %v173 = vld [vmem:[%s127 + $0x58] sm:$0xff]
        %v174 = vld [vmem:[%s127 + $0x60] sm:$0xff]
        %v175 = vld [vmem:[%s127 + $0x68] sm:$0xff]
        %v176 = vld [vmem:[%s127 + $0x70] sm:$0xff]
        %v177 = vld [vmem:[%s127 + $0x78] sm:$0xff]
        %v178 = vld [vmem:[%s127 + $0x80] sm:$0xff]
        %v179 = vld [vmem:[%s127 + $0x88] sm:$0xff]
        %v180 = vld [vmem:[%s127 + $0x90] sm:$0xff]
        %v181 = vld [vmem:[%s127 + $0x98] sm:$0xff]
        %v182 = vld [vmem:[%s127 + $0xa0] sm:$0xff]
        %v183 = vld [vmem:[%s127 + $0xa8] sm:$0xff]
        %v184 = vld [vmem:[%s127 + $0xb0] sm:$0xff]
        %v185 = vld [vmem:[%s127 + $0xb8] sm:$0xff]
        %v186 = vld [vmem:[%s127 + $0xc0] sm:$0xff]
        %v187 = vld [vmem:[%s127 + $0xc8] sm:$0xff]
        %v188 = vld [vmem:[%s127 + $0xd0] sm:$0xff]
        %v189 = vld [vmem:[%s127 + $0xd8] sm:$0xff]
        %v190 = vld [vmem:[%s127 + $0xe0] sm:$0xff]
        %v191 = vld [vmem:[%s127 + $0xe8] sm:$0xff]
        %v192 = vld [vmem:[%s127 + $0xf0] sm:$0xff]
        %v193 = vld [vmem:[%s127 + $0xf8] sm:$0xff]
        %v194 = vld [vmem:[%s127 + $0x100] sm:$0xff]
        %v195 = vld [vmem:[%s127 + $0x108] sm:$0xff]
        %v196 = vld [vmem:[%s127 + $0x110] sm:$0xff]
        %v197 = vld [vmem:[%s127 + $0x118] sm:$0xff]
        %v198 = vld [vmem:[%s127 + $0x120] sm:$0xff]
        %v199 = vld [vmem:[%s127 + $0x128] sm:$0xff]
        %v200 = vld [vmem:[%s127 + $0x130] sm:$0xff]
        %v201 = vld [vmem:[%s127 + $0x138] sm:$0xff]
        %v202 = vld [vmem:[%s127 + $0x140] sm:$0xff]
        %v203 = vld [vmem:[%s127 + $0x148] sm:$0xff]
        %v204 = vld [vmem:[%s127 + $0x150] sm:$0xff]
        %v205 = vld [vmem:[%s127 + $0x158] sm:$0xff]
        %v206 = vld [vmem:[%s127 + $0x160] sm:$0xff]
        %v207 = vld [vmem:[%s127 + $0x168] sm:$0xff]
        %v208 = vld [vmem:[%s127 + $0x170] sm:$0xff]
        %v209 = vld [vmem:[%s127 + $0x178] sm:$0xff]
        %v210 = vld [vmem:[%s127 + $0x180] sm:$0xff]
        %v211 = vld [vmem:[%s127 + $0x188] sm:$0xff]
        %v212 = vld [vmem:[%s127 + $0x190] sm:$0xff]
        %v213 = vld [vmem:[%s127 + $0x198] sm:$0xff]
        %v214 = vld [vmem:[%s127 + $0x1a0] sm:$0xff]
        %v215 = vld [vmem:[%s127 + $0x1a8] sm:$0xff]
        %v216 = vld [vmem:[%s127 + $0x1b0] sm:$0xff]
        %v217 = vld [vmem:[%s127 + $0x1b8] sm:$0xff]
        %v218 = vld [vmem:[%s127 + $0x1c0] sm:$0xff]
        %v219 = vld [vmem:[%s127 + $0x1c8] sm:$0xff]
        %v220 = vld [vmem:[%s127 + $0x1d0] sm:$0xff]
        %v221 = vld [vmem:[%s127 + $0x1d8] sm:$0xff]
        %v222 = vld [vmem:[%s127 + $0x1e0] sm:$0xff]
        %v223 = vld [vmem:[%s127 + $0x1e8] sm:$0xff]
        %v224 = vld [vmem:[%s127 + $0x1f0] sm:$0xff]
        %v225 = vld [vmem:[%s127 + $0x1f8] sm:$0xff]
        %v226 = vld [vmem:[%s127 + $0x200] sm:$0xff]
        %v227 = vld [vmem:[%s127 + $0x208] sm:$0xff]
        %v228 = vld [vmem:[%s127 + $0x210] sm:$0xff]
        %v229 = vld [vmem:[%s127 + $0x218] sm:$0xff]
        %v230 = vld [vmem:[%s127 + $0x220] sm:$0xff]
        %v231 = vld [vmem:[%s127 + $0x228] sm:$0xff]
        %v232 = vld [vmem:[%s127 + $0x230] sm:$0xff]
        %v233 = vld [vmem:[%s127 + $0x238] sm:$0xff]
        %v234 = vld [vmem:[%s127 + $0x240] sm:$0xff]
        %v235 = vld [vmem:[%s127 + $0x248] sm:$0xff]
        %v236 = vld [vmem:[%s127 + $0x250] sm:$0xff]
        %v237 = vld [vmem:[%s127 + $0x258] sm:$0xff]
        %v238 = vld [vmem:[%s127 + $0x260] sm:$0xff]
        %v239 = vld [vmem:[%s127 + $0x268] sm:$0xff]
        %v240 = vld [vmem:[%s127 + $0x270] sm:$0xff]
        %v241 = vld [vmem:[%s127 + $0x278] sm:$0xff]
        %v242 = vld [vmem:[%s127 + $0x280] sm:$0xff]
        %v243 = vld [vmem:[%s127 + $0x288] sm:$0xff]
        %v244 = vld [vmem:[%s127 + $0x290] sm:$0xff]
        %v245 = vld [vmem:[%s127 + $0x298] sm:$0xff]
        %v246 = vld [vmem:[%s127 + $0x2a0] sm:$0xff]
        %v247 = vld [vmem:[%s127 + $0x2a8] sm:$0xff]
        %v248 = vld [vmem:[%s127 + $0x2b0] sm:$0xff]
        %v249 = vld [vmem:[%s127 + $0x2b8] sm:$0xff]
        %v250 = vld [vmem:[%s127 + $0x2c0] sm:$0xff]
        %v251 = vld [vmem:[%s127 + $0x2c8] sm:$0xff]
        %v252 = vld [vmem:[%s127 + $0x2d0] sm:$0xff]
        %v253 = vld [vmem:[%s127 + $0x2d8] sm:$0xff]
        %v254 = vld [vmem:[%s127 + $0x2e0] sm:$0xff]
        %v255 = vld [vmem:[%s127 + $0x2e8] sm:$0xff]
        %v256 = vld [vmem:[%s127 + $0x2f0] sm:$0xff]
        %v257 = vld [vmem:[%s127 + $0x2f8] sm:$0xff]
        %v258 = vmax.f32 %v162, -1.0
        %v259 = vmax.f32 %v163, -1.0
        %v260 = vmax.f32 %v164, -1.0
        %v261 = vmax.f32 %v165, -1.0
        %v262 = vmax.f32 %v166, -1.0
        %v263 = vmax.f32 %v167, -1.0
        %v264 = vmax.f32 %v168, -1.0
        %v265 = vmax.f32 %v169, -1.0
        %v266 = vmax.f32 %v170, -1.0
        %v267 = vmax.f32 %v171, -1.0
        %v268 = vmax.f32 %v172, -1.0
        %v269 = vmax.f32 %v173, -1.0
        %v270 = vmax.f32 %v174, -1.0
        %v271 = vmax.f32 %v175, -1.0
        %v272 = vmax.f32 %v176, -1.0
        %v273 = vmax.f32 %v177, -1.0
        %v274 = vmax.f32 %v178, -1.0
        %v275 = vmax.f32 %v179, -1.0
        %v276 = vmax.f32 %v180, -1.0
        %v277 = vmax.f32 %v181, -1.0
        %v278 = vmax.f32 %v182, -1.0
        %v279 = vmax.f32 %v183, -1.0
        %v280 = vmax.f32 %v184, -1.0
        %v281 = vmax.f32 %v185, -1.0
        %v282 = vmax.f32 %v186, -1.0
        %v283 = vmax.f32 %v187, -1.0
        %v284 = vmax.f32 %v188, -1.0
        %v285 = vmax.f32 %v189, -1.0
        %v286 = vmax.f32 %v190, -1.0
        %v287 = vmax.f32 %v191, -1.0
        %v288 = vmax.f32 %v192, -1.0
        %v289 = vmax.f32 %v193, -1.0
        %v290 = vmax.f32 %v194, -1.0
        %v291 = vmax.f32 %v195, -1.0
        %v292 = vmax.f32 %v196, -1.0
        %v293 = vmax.f32 %v197, -1.0
        %v294 = vmax.f32 %v198, -1.0
        %v295 = vmax.f32 %v199, -1.0
        %v296 = vmax.f32 %v200, -1.0
        %v297 = vmax.f32 %v201, -1.0
        %v298 = vmax.f32 %v202, -1.0
        %v299 = vmax.f32 %v203, -1.0
        %v300 = vmax.f32 %v204, -1.0
        %v301 = vmax.f32 %v205, -1.0
        %v302 = vmax.f32 %v206, -1.0
        %v303 = vmax.f32 %v207, -1.0
        %v304 = vmax.f32 %v208, -1.0
        %v305 = vmax.f32 %v209, -1.0
        %v306 = vmax.f32 %v210, -1.0
        %v307 = vmax.f32 %v211, -1.0
        %v308 = vmax.f32 %v212, -1.0
        %v309 = vmax.f32 %v213, -1.0
        %v310 = vmax.f32 %v214, -1.0
        %v311 = vmax.f32 %v215, -1.0
        %v312 = vmax.f32 %v216, -1.0
        %v313 = vmax.f32 %v217, -1.0
        %v314 = vmax.f32 %v218, -1.0
        %v315 = vmax.f32 %v219, -1.0
        %v316 = vmax.f32 %v220, -1.0
        %v317 = vmax.f32 %v221, -1.0
        %v318 = vmax.f32 %v222, -1.0
        %v319 = vmax.f32 %v223, -1.0
        %v320 = vmax.f32 %v224, -1.0
        %v321 = vmax.f32 %v225, -1.0
        %v322 = vmax.f32 %v226, -1.0
        %v323 = vmax.f32 %v227, -1.0
        %v324 = vmax.f32 %v228, -1.0
        %v325 = vmax.f32 %v229, -1.0
        %v326 = vmax.f32 %v230, -1.0
        %v327 = vmax.f32 %v231, -1.0
        %v328 = vmax.f32 %v232, -1.0
        %v329 = vmax.f32 %v233, -1.0
        %v330 = vmax.f32 %v234, -1.0
        %v331 = vmax.f32 %v235, -1.0
        %v332 = vmax.f32 %v236, -1.0
        %v333 = vmax.f32 %v237, -1.0
        %v334 = vmax.f32 %v238, -1.0
        %v335 = vmax.f32 %v239, -1.0
        %v336 = vmax.f32 %v240, -1.0
        %v337 = vmax.f32 %v241, -1.0
        %v338 = vmax.f32 %v242, -1.0
        %v339 = vmax.f32 %v243, -1.0
        %v340 = vmax.f32 %v244, -1.0
        %v341 = vmax.f32 %v245, -1.0
        %v342 = vmax.f32 %v246, -1.0
        %v343 = vmax.f32 %v247, -1.0
        %v344 = vmax.f32 %v248, -1.0
        %v345 = vmax.f32 %v249, -1.0
        %v346 = vmax.f32 %v250, -1.0
        %v347 = vmax.f32 %v251, -1.0
        %v348 = vmax.f32 %v252, -1.0
        %v349 = vmax.f32 %v253, -1.0
        %v350 = vmax.f32 %v254, -1.0
        %v351 = vmax.f32 %v255, -1.0
        %v352 = vmax.f32 %v256, -1.0
        %v353 = vmax.f32 %v257, -1.0
        %v354 = vmin.f32 %v258, 1.0
        %v355 = vmin.f32 %v259, 1.0
        %v356 = vmin.f32 %v260, 1.0
        %v357 = vmin.f32 %v261, 1.0
        %v358 = vmin.f32 %v262, 1.0
        %v359 = vmin.f32 %v263, 1.0
        %v360 = vmin.f32 %v264, 1.0
        %v361 = vmin.f32 %v265, 1.0
        %v362 = vmin.f32 %v266, 1.0
        %v363 = vmin.f32 %v267, 1.0
        %v364 = vmin.f32 %v268, 1.0
        %v365 = vmin.f32 %v269, 1.0
        %v366 = vmin.f32 %v270, 1.0
        %v367 = vmin.f32 %v271, 1.0
        %v368 = vmin.f32 %v272, 1.0
        %v369 = vmin.f32 %v273, 1.0
        %v370 = vmin.f32 %v274, 1.0
        %v371 = vmin.f32 %v275, 1.0
        %v372 = vmin.f32 %v276, 1.0
        %v373 = vmin.f32 %v277, 1.0
        %v374 = vmin.f32 %v278, 1.0
        %v375 = vmin.f32 %v279, 1.0
        %v376 = vmin.f32 %v280, 1.0
        %v377 = vmin.f32 %v281, 1.0
        %v378 = vmin.f32 %v282, 1.0
        %v379 = vmin.f32 %v283, 1.0
        %v380 = vmin.f32 %v284, 1.0
        %v381 = vmin.f32 %v285, 1.0
        %v382 = vmin.f32 %v286, 1.0
        %v383 = vmin.f32 %v287, 1.0
        %v384 = vmin.f32 %v288, 1.0
        %v385 = vmin.f32 %v289, 1.0
        %v386 = vmin.f32 %v290, 1.0
        %v387 = vmin.f32 %v291, 1.0
        %v388 = vmin.f32 %v292, 1.0
        %v389 = vmin.f32 %v293, 1.0
        %v390 = vmin.f32 %v294, 1.0
        %v391 = vmin.f32 %v295, 1.0
        %v392 = vmin.f32 %v296, 1.0
        %v393 = vmin.f32 %v297, 1.0
        %v394 = vmin.f32 %v298, 1.0
        %v395 = vmin.f32 %v299, 1.0
        %v396 = vmin.f32 %v300, 1.0
        %v397 = vmin.f32 %v301, 1.0
        %v398 = vmin.f32 %v302, 1.0
        %v399 = vmin.f32 %v303, 1.0
        %v400 = vmin.f32 %v304, 1.0
        %v401 = vmin.f32 %v305, 1.0
        %v402 = vmin.f32 %v306, 1.0
        %v403 = vmin.f32 %v307, 1.0
        %v404 = vmin.f32 %v308, 1.0
        %v405 = vmin.f32 %v309, 1.0
        %v406 = vmin.f32 %v310, 1.0
        %v407 = vmin.f32 %v311, 1.0
        %v408 = vmin.f32 %v312, 1.0
        %v409 = vmin.f32 %v313, 1.0
        %v410 = vmin.f32 %v314, 1.0
        %v411 = vmin.f32 %v315, 1.0
        %v412 = vmin.f32 %v316, 1.0
        %v413 = vmin.f32 %v317, 1.0
        %v414 = vmin.f32 %v318, 1.0
        %v415 = vmin.f32 %v319, 1.0
        %v416 = vmin.f32 %v320, 1.0
        %v417 = vmin.f32 %v321, 1.0
        %v418 = vmin.f32 %v322, 1.0
        %v419 = vmin.f32 %v323, 1.0
        %v420 = vmin.f32 %v324, 1.0
        %v421 = vmin.f32 %v325, 1.0
        %v422 = vmin.f32 %v326, 1.0
        %v423 = vmin.f32 %v327, 1.0
        %v424 = vmin.f32 %v328, 1.0
        %v425 = vmin.f32 %v329, 1.0
        %v426 = vmin.f32 %v330, 1.0
        %v427 = vmin.f32 %v331, 1.0
        %v428 = vmin.f32 %v332, 1.0
        %v429 = vmin.f32 %v333, 1.0
        %v430 = vmin.f32 %v334, 1.0
        %v431 = vmin.f32 %v335, 1.0
        %v432 = vmin.f32 %v336, 1.0
        %v433 = vmin.f32 %v337, 1.0
        %v434 = vmin.f32 %v338, 1.0
        %v435 = vmin.f32 %v339, 1.0
        %v436 = vmin.f32 %v340, 1.0
        %v437 = vmin.f32 %v341, 1.0
        %v438 = vmin.f32 %v342, 1.0
        %v439 = vmin.f32 %v343, 1.0
        %v440 = vmin.f32 %v344, 1.0
        %v441 = vmin.f32 %v345, 1.0
        %v442 = vmin.f32 %v346, 1.0
        %v443 = vmin.f32 %v347, 1.0
        %v444 = vmin.f32 %v348, 1.0
        %v445 = vmin.f32 %v349, 1.0
        %v446 = vmin.f32 %v350, 1.0
        %v447 = vmin.f32 %v351, 1.0
        %v448 = vmin.f32 %v352, 1.0
        %v449 = vmin.f32 %v353, 1.0
        %450 = vst [vmem:[%s145] sm:$0xff] %v354
        %vm451 = vcmask 261120
        %452 = vst.msk [vmem:[%s145 + $0x8] sm:$0xff] %vm451, %v355
        %453 = vst [vmem:[%s145 + $0x10] sm:$0xff] %v356
        %454 = vst.msk [vmem:[%s145 + $0x18] sm:$0xff] %vm451, %v357
        %455 = vst [vmem:[%s145 + $0x20] sm:$0xff] %v358
        %456 = vst.msk [vmem:[%s145 + $0x28] sm:$0xff] %vm451, %v359
        %457 = vst [vmem:[%s145 + $0x30] sm:$0xff] %v360
        %458 = vst.msk [vmem:[%s145 + $0x38] sm:$0xff] %vm451, %v361
        %459 = vst [vmem:[%s145 + $0x40] sm:$0xff] %v362
        %460 = vst.msk [vmem:[%s145 + $0x48] sm:$0xff] %vm451, %v363
        %461 = vst [vmem:[%s145 + $0x50] sm:$0xff] %v364
        %462 = vst.msk [vmem:[%s145 + $0x58] sm:$0xff] %vm451, %v365
        %463 = vst [vmem:[%s145 + $0x60] sm:$0xff] %v366
        %464 = vst.msk [vmem:[%s145 + $0x68] sm:$0xff] %vm451, %v367
        %465 = vst [vmem:[%s145 + $0x70] sm:$0xff] %v368
        %466 = vst.msk [vmem:[%s145 + $0x78] sm:$0xff] %vm451, %v369
        %467 = vst [vmem:[%s145 + $0x80] sm:$0xff] %v370
        %468 = vst.msk [vmem:[%s145 + $0x88] sm:$0xff] %vm451, %v371
        %469 = vst [vmem:[%s145 + $0x90] sm:$0xff] %v372
        %470 = vst.msk [vmem:[%s145 + $0x98] sm:$0xff] %vm451, %v373
        %471 = vst [vmem:[%s145 + $0xa0] sm:$0xff] %v374
        %472 = vst.msk [vmem:[%s145 + $0xa8] sm:$0xff] %vm451, %v375
        %473 = vst [vmem:[%s145 + $0xb0] sm:$0xff] %v376
        %474 = vst.msk [vmem:[%s145 + $0xb8] sm:$0xff] %vm451, %v377
        %475 = vst [vmem:[%s145 + $0xc0] sm:$0xff] %v378
        %476 = vst.msk [vmem:[%s145 + $0xc8] sm:$0xff] %vm451, %v379
        %477 = vst [vmem:[%s145 + $0xd0] sm:$0xff] %v380
        %478 = vst.msk [vmem:[%s145 + $0xd8] sm:$0xff] %vm451, %v381
        %479 = vst [vmem:[%s145 + $0xe0] sm:$0xff] %v382
        %480 = vst.msk [vmem:[%s145 + $0xe8] sm:$0xff] %vm451, %v383
        %481 = vst [vmem:[%s145 + $0xf0] sm:$0xff] %v384
        %482 = vst.msk [vmem:[%s145 + $0xf8] sm:$0xff] %vm451, %v385
        %483 = vst [vmem:[%s145 + $0x100] sm:$0xff] %v386
        %484 = vst.msk [vmem:[%s145 + $0x108] sm:$0xff] %vm451, %v387
        %485 = vst [vmem:[%s145 + $0x110] sm:$0xff] %v388
        %486 = vst.msk [vmem:[%s145 + $0x118] sm:$0xff] %vm451, %v389
        %487 = vst [vmem:[%s145 + $0x120] sm:$0xff] %v390
        %488 = vst.msk [vmem:[%s145 + $0x128] sm:$0xff] %vm451, %v391
        %489 = vst [vmem:[%s145 + $0x130] sm:$0xff] %v392
        %490 = vst.msk [vmem:[%s145 + $0x138] sm:$0xff] %vm451, %v393
        %491 = vst [vmem:[%s145 + $0x140] sm:$0xff] %v394
        %492 = vst.msk [vmem:[%s145 + $0x148] sm:$0xff] %vm451, %v395
        %493 = vst [vmem:[%s145 + $0x150] sm:$0xff] %v396
        %494 = vst.msk [vmem:[%s145 + $0x158] sm:$0xff] %vm451, %v397
        %495 = vst [vmem:[%s145 + $0x160] sm:$0xff] %v398
        %496 = vst.msk [vmem:[%s145 + $0x168] sm:$0xff] %vm451, %v399
        %497 = vst [vmem:[%s145 + $0x170] sm:$0xff] %v400
        %498 = vst.msk [vmem:[%s145 + $0x178] sm:$0xff] %vm451, %v401
        %499 = vst [vmem:[%s145 + $0x180] sm:$0xff] %v402
        %500 = vst.msk [vmem:[%s145 + $0x188] sm:$0xff] %vm451, %v403
        %501 = vst [vmem:[%s145 + $0x190] sm:$0xff] %v404
        %502 = vst.msk [vmem:[%s145 + $0x198] sm:$0xff] %vm451, %v405
        %503 = vst [vmem:[%s145 + $0x1a0] sm:$0xff] %v406
        %504 = vst.msk [vmem:[%s145 + $0x1a8] sm:$0xff] %vm451, %v407
        %505 = vst [vmem:[%s145 + $0x1b0] sm:$0xff] %v408
        %506 = vst.msk [vmem:[%s145 + $0x1b8] sm:$0xff] %vm451, %v409
        %507 = vst [vmem:[%s145 + $0x1c0] sm:$0xff] %v410
        %508 = vst.msk [vmem:[%s145 + $0x1c8] sm:$0xff] %vm451, %v411
        %509 = vst [vmem:[%s145 + $0x1d0] sm:$0xff] %v412
        %510 = vst.msk [vmem:[%s145 + $0x1d8] sm:$0xff] %vm451, %v413
        %511 = vst [vmem:[%s145 + $0x1e0] sm:$0xff] %v414
        %512 = vst.msk [vmem:[%s145 + $0x1e8] sm:$0xff] %vm451, %v415
        %513 = vst [vmem:[%s145 + $0x1f0] sm:$0xff] %v416
        %514 = vst.msk [vmem:[%s145 + $0x1f8] sm:$0xff] %vm451, %v417
        %515 = vst [vmem:[%s145 + $0x200] sm:$0xff] %v418
        %516 = vst.msk [vmem:[%s145 + $0x208] sm:$0xff] %vm451, %v419
        %517 = vst [vmem:[%s145 + $0x210] sm:$0xff] %v420
        %518 = vst.msk [vmem:[%s145 + $0x218] sm:$0xff] %vm451, %v421
        %519 = vst [vmem:[%s145 + $0x220] sm:$0xff] %v422
        %520 = vst.msk [vmem:[%s145 + $0x228] sm:$0xff] %vm451, %v423
        %521 = vst [vmem:[%s145 + $0x230] sm:$0xff] %v424
        %522 = vst.msk [vmem:[%s145 + $0x238] sm:$0xff] %vm451, %v425
        %523 = vst [vmem:[%s145 + $0x240] sm:$0xff] %v426
        %524 = vst.msk [vmem:[%s145 + $0x248] sm:$0xff] %vm451, %v427
        %525 = vst [vmem:[%s145 + $0x250] sm:$0xff] %v428
        %526 = vst.msk [vmem:[%s145 + $0x258] sm:$0xff] %vm451, %v429
        %527 = vst [vmem:[%s145 + $0x260] sm:$0xff] %v430
        %528 = vst.msk [vmem:[%s145 + $0x268] sm:$0xff] %vm451, %v431
        %529 = vst [vmem:[%s145 + $0x270] sm:$0xff] %v432
        %530 = vst.msk [vmem:[%s145 + $0x278] sm:$0xff] %vm451, %v433
        %531 = vst [vmem:[%s145 + $0x280] sm:$0xff] %v434
        %532 = vst.msk [vmem:[%s145 + $0x288] sm:$0xff] %vm451, %v435
        %533 = vst [vmem:[%s145 + $0x290] sm:$0xff] %v436
        %534 = vst.msk [vmem:[%s145 + $0x298] sm:$0xff] %vm451, %v437
        %535 = vst [vmem:[%s145 + $0x2a0] sm:$0xff] %v438
        %536 = vst.msk [vmem:[%s145 + $0x2a8] sm:$0xff] %vm451, %v439
        %537 = vst [vmem:[%s145 + $0x2b0] sm:$0xff] %v440
        %538 = vst.msk [vmem:[%s145 + $0x2b8] sm:$0xff] %vm451, %v441
        %539 = vst [vmem:[%s145 + $0x2c0] sm:$0xff] %v442
        %540 = vst.msk [vmem:[%s145 + $0x2c8] sm:$0xff] %vm451, %v443
        %541 = vst [vmem:[%s145 + $0x2d0] sm:$0xff] %v444
        %542 = vst.msk [vmem:[%s145 + $0x2d8] sm:$0xff] %vm451, %v445
        %543 = vst [vmem:[%s145 + $0x2e0] sm:$0xff] %v446
        %544 = vst.msk [vmem:[%s145 + $0x2e8] sm:$0xff] %vm451, %v447
        %545 = vst [vmem:[%s145 + $0x2f0] sm:$0xff] %v448
        %546 = vst.msk [vmem:[%s145 + $0x2f8] sm:$0xff] %vm451, %v449
        %s547 = sand.u32 %s52, 1
        %s548 = scalar_lea.sflag [#allocation4], %s547
        %s549 = sand.u32 %s52, 1
        %s550 = smul.addr %s549, 768
        %s551 = scalar_lea.vmem [#allocation5], %s550
        // Predicated region
        $region29: #{tpu_custom_call.1} parent=23 // pred_check
          %p552 = pneg %p62
        $region30: #{tpu_custom_call.1} parent=23 // pred_check_branch
          %554 = sbr.rel (%p552) target = $region32
        $region31: #{tpu_custom_call.1} parent=23 // pred_region
          %s555 = smul.u32 2, %s18
          %s556 = ssub.s32 9, %s555
          %p557 = scmp.lt.s32.totalorder %s556, 2
          %s558 = scalar_select %p557, %s556, 2
          %s559 = smul.u32 128, %s558
          %s560 = smul.u32 %s559, 3
          %s561 = smul.u32 %s560, 8
          %s562 = smul.u32 %s561, 2
          %s564 = ssub.s32 12288, %s562
          %565 = vsyncadd %s548, %s564
          %p566 = scmp.ne.s32.totalorder 0, %s562
          %s567 = smul.addr %s555, 48
          %s568 = smul.addr %s567, 128
          %s569 = scalar_lea.hbm %s1, %s568
          %s570 = smul.u32 %s558, 24
          %s571 = smul.u32 16, %s570
          %s572 = sshll.u32 %s551, 4
          %s573 = int_to_ptr.vmem [resolvable:$true] %s572
          %s574 = sshll.u32 %s571, 4
          %578 = dma.vmem_to_hbm [thread:$0]  (%p566), %s573, %s574, %s569, %s548, 256, 256, 16
        $region32: #{tpu_custom_call.1} parent=23 // pred_fallthru
          _
      $region24: #{tpu_custom_call.1} parent=5 // pred_fallthru
        _
      %p579 = scmp.le.s32.totalorder 2, %s13
      // Predicated region
      $region33: #{tpu_custom_call.1} parent=5 // pred_check
        %p580 = pneg %p579
      $region34: #{tpu_custom_call.1} parent=5 // pred_check_branch
        %582 = sbr.rel (%p580) target = $region36
      $region35: #{tpu_custom_call.1} parent=5 // pred_region
        %s583 = ssub.s32 %s13, 2
        // Predicated region
        $region37: #{tpu_custom_call.1} parent=35 // pred_check
          %p584 = pneg %p68
        $region38: #{tpu_custom_call.1} parent=35 // pred_check_branch
          %586 = sbr.rel (%p584) target = $region40
        $region39: #{tpu_custom_call.1} parent=35 // pred_region
          %s587 = sand.u32 %s53, 1
          %s588 = scalar_lea.sflag [#allocation4], %s587
          %s589 = sand.u32 %s53, 1
          %s590 = smul.addr %s589, 768
          %s591 = scalar_lea.vmem [#allocation5], %s590
          %592 = dma.done %s588, 12288
        $region40: #{tpu_custom_call.1} parent=35 // pred_fallthru
          _
      $region36: #{tpu_custom_call.1} parent=5 // pred_fallthru
        _
    $region6: #{tpu_custom_call.1} parent=1 // loop_footer
      %s17 = sadd.s32 1, %s13
    $region7: #{tpu_custom_call.1} parent=1 // loop_footer_branch
      %12 = sbr.rel target = $region3
    $region8: #{tpu_custom_call.1} parent=1 // loop_exit
      _
    %593 = vsyncpa [#allocation3], 1
    %s594 = scalar_lea.sflag [#allocation3], 1
    %595 = vsyncpa %s594, 1
    %596 = vsyncpa [#allocation4], 1
    %s597 = scalar_lea.sflag [#allocation4], 1
    %598 = vsyncpa %s597, 1

</llo_original>
